<compile_context>
chip_gen: v7x
topology: tpu7x:2x2x1
jax: 0.10.0
libtpu: 0.0.40
codegen_flags: <defaults>
</compile_context>

<pallas_src>
import numpy as np
import jax
import jax.numpy as jnp
from jax import lax
from jax.experimental import pallas as pl
from jax.experimental.pallas import tpu as pltpu


def _round_up(x, m):
    return ((x + m - 1) // m) * m


def _softplus(x):
    # softplus(x) = -logsigmoid(-x), numerically stable, pure f32 path.
    return jnp.maximum(x, 0.0) + jnp.log1p(jnp.exp(-jnp.abs(x)))


def _direction_kernel(fa_ref, fb_ref, posT_ref, negT_ref, o_ref, simT_ref):
    """One direction of the SUB cross loss for one anchor-row tile.

    fa_ref   : [TM, D]    row tile of the anchor features (rows i)
    fb_ref   : [N,  D]    full other-side features (resident across the grid)
    posT_ref : [N, TM]    (mask_sents_i * mask[i, j])^T   (sublane = j, lane = i)
    negT_ref : [N, TM]    (1 - mask[i, k])^T
    o_ref    : [1, 8, 128] per-tile partials: [0,0,0] = loss, [0,1,0] = pair
    simT_ref : VMEM scratch [N, TM] holding simT[j, i] = <fb_j, fa_i>
    """
    # MXU matmul with f32 accumulation. Computing the transposed similarity
    # directly (fb x fa^T) avoids any in-kernel transpose.
    simT = lax.dot_general(fb_ref[...], fa_ref[...],
                           (((1,), (1,)), ((), ())),
                           preferred_element_type=jnp.float32)      # [N, TM]
    simT_ref[...] = simT

    posT = posT_ref[...]                                            # [N, TM] f32
    negT = negT_ref[...]                                            # [N, TM] f32
    n, tm = posT.shape

    # Loop-invariant work hoisted out of the j-loop.
    pos_count = jnp.sum(posT, axis=0, keepdims=True)                # [1, TM]
    neg_count = jnp.sum(negT, axis=0, keepdims=True)                # [1, TM]
    pair_partial = jnp.sum(pos_count * neg_count)

    def body(j, acc):
        s_pos = simT_ref[pl.ds(j, 1), :]      # [1, TM]  S[i, j]
        p_j = posT_ref[pl.ds(j, 1), :]        # [1, TM]  weight of j as a positive
        x = simT - s_pos                      # [N, TM]  S[i, k] - S[i, j]
        row = jnp.sum(negT * _softplus(x), axis=0, keepdims=True)   # [1, TM]
        return acc + p_j * row

    acc = lax.fori_loop(0, n, body, jnp.zeros((1, tm), jnp.float32),
                        unroll=(n <= 16))
    loss_partial = jnp.sum(acc)

    # Lane-dense (8,128) output tile; values at [0,0] (loss) and [1,0] (pair).
    sub = lax.broadcasted_iota(jnp.int32, (8, 128), 0)
    vals = jnp.where(sub == 0, loss_partial,
                     jnp.where(sub == 1, pair_partial, 0.0))
    o_ref[...] = vals[None].astype(jnp.float32)


def _direction_partials(fa, fb, pos, neg, *, tile_rows=256):
    """Partial (loss_sum, pair_sum) for one direction of the loss."""
    if tile_rows % 128 != 0:
        raise ValueError("tile_rows must be a multiple of 128")
    m, d = fa.shape
    n = fb.shape[0]

    d_pad = _round_up(d, 128)                 # zero-pad is value-neutral for the dot
    tm = min(tile_rows, _round_up(m, 8))      # lane tile over anchor rows
    m_pad = _round_up(m, tm)
    num_tiles = m_pad // tm

    # Pad in the wrapper; padded rows/cols carry pos = neg = 0 -> contribute 0.
    fa_p = jnp.zeros((m_pad, d_pad), fa.dtype).at[:m, :d].set(fa)
    fb_p = jnp.zeros((n, d_pad), fb.dtype).at[:, :d].set(fb)
    posT = jnp.zeros((n, m_pad), jnp.float32).at[:, :m].set(pos.T)
    negT = jnp.zeros((n, m_pad), jnp.float32).at[:, :m].set(neg.T)

    out = pl.pallas_call(
        _direction_kernel,
        out_shape=jax.ShapeDtypeStruct((num_tiles, 8, 128), jnp.float32),
        grid=(num_tiles,),
        in_specs=[
            pl.BlockSpec((tm, d_pad), lambda i: (i, 0)),   # anchor row tile
            pl.BlockSpec((n, d_pad), lambda i: (0, 0)),    # other side, resident
            pl.BlockSpec((n, tm), lambda i: (0, i)),       # pos^T tile
            pl.BlockSpec((n, tm), lambda i: (0, i)),       # neg^T tile
        ],
        out_specs=pl.BlockSpec((1, 8, 128), lambda i: (i, 0, 0)),
        scratch_shapes=[pltpu.VMEM((n, tm), jnp.float32)],
        compiler_params=pltpu.CompilerParams(
            dimension_semantics=("parallel",),             # megacore-shardable (v7x)
            vmem_limit_bytes=48 * 1024 * 1024),
    )(fa_p, fb_p, posT, negT)

    loss = jnp.sum(out[:, 0, 0])
    pair = jnp.sum(out[:, 1, 0])
    return loss, pair


def sub_cross_loss(features1, features2, mask, mask_sents1, mask_sents2,
                   sim_type="dot", tile_rows=256):
    """JAX/Pallas equivalent of SUB_Cross_Loss.forward (returns scalar loss)."""
    n1, d = features1.shape
    n2, _ = features2.shape
    if mask.shape != (n1, n2):
        raise ValueError("Num of mask does not match num of features")
    if mask_sents1.shape[0] != n1:
        raise ValueError("Num of mask_sents1 does not match num of features")
    if mask_sents2.shape[0] != n2:
        raise ValueError("Num of mask_sents2 does not match num of features")

    f1, f2 = features1, features2            # keep native dtype (bf16 stays bf16)
    if sim_type == "cos":
        f1 = (f1 / jnp.maximum(jnp.linalg.norm(f1.astype(jnp.float32), axis=-1,
                                               keepdims=True), 1e-12)).astype(f1.dtype)
        f2 = (f2 / jnp.maximum(jnp.linalg.norm(f2.astype(jnp.float32), axis=-1,
                                               keepdims=True), 1e-12)).astype(f2.dtype)

    m = mask.astype(jnp.float32)
    ms1 = mask_sents1.astype(jnp.float32).reshape(n1, 1)
    ms2 = mask_sents2.astype(jnp.float32).reshape(n2, 1)

    pos1, neg1 = ms1 * m, 1.0 - m            # direction 1: rows of f1 vs cols of f2
    mt = m.T                                 # transpose done wrapper-side (not in-kernel)
    pos2, neg2 = ms2 * mt, 1.0 - mt          # direction 2

    l1, p1 = _direction_partials(f1, f2, pos1, neg1, tile_rows=tile_rows)
    l2, p2 = _direction_partials(f2, f1, pos2, neg2, tile_rows=tile_rows)

    loss = l1 + l2
    pair = p1 + p2
    # Reference: divide only when pair_num > 0 (loss is exactly 0 otherwise).
    # TODO(synk): the torch module's isnan/isinf debug print + ValueError is a
    # debug-only path and is not replicated here.
    return jnp.where(pair > 0.0, loss / jnp.maximum(pair, 1.0), loss)


def _reference_loss(f1, f2, mask, ms1, ms2):
    """Literal numpy transcription of the PyTorch forward (for verification)."""
    f1 = np.asarray(f1, np.float64)
    f2 = np.asarray(f2, np.float64)
    mask = np.asarray(mask, np.float64)
    ms1 = np.asarray(ms1) > 0
    ms2 = np.asarray(ms2) > 0

    def softplus(x):
        return np.maximum(x, 0.0) + np.log1p(np.exp(-np.abs(x)))

    def compute(fa, fb, m, msa):
        mp = m[msa]
        mn = (1.0 - m)[msa]
        sim = fa[msa] @ fb.T
        loss, pair = 0.0, 0.0
        for i in range(sim.shape[0]):
            pn, nn = mp[i].sum(), mn[i].sum()
            if pn > 0 and nn > 0:
                pair += pn * nn
                sp = sim[i][mp[i] > 0][:, None]
                sn = sim[i][mn[i] > 0][None, :]
                loss += softplus(-(sp - sn)).sum()   # -logsigmoid(sp - sn)
        return loss, pair

    l1, p1 = compute(f1, f2, mask, ms1)
    l2, p2 = compute(f2, f1, mask.T, ms2)
    loss, pair = l1 + l2, p1 + p2
    if pair > 0:
        loss = loss / pair
    return loss


if __name__ == "__main__":
    keys = jax.random.split(jax.random.PRNGKey(0), 10)

    # --- Case 1: small toy shapes matching the module's typical use ---
    N1, N2, D = 8, 8, 32
    features1 = jax.random.normal(keys[0], (N1, D), jnp.float32)
    features2 = jax.random.normal(keys[1], (N2, D), jnp.float32)
    mask = (jax.random.uniform(keys[2], (N1, N2)) > 0.5).astype(jnp.float32)
    mask_sents1 = jax.random.uniform(keys[3], (N1,)) > 0.3
    mask_sents2 = jax.random.uniform(keys[4], (N2,)) > 0.3

    loss = sub_cross_loss(features1, features2, mask, mask_sents1, mask_sents2)
    loss = jax.block_until_ready(loss)
    ref = _reference_loss(features1, features2, mask, mask_sents1, mask_sents2)
    np.testing.assert_allclose(np.asarray(loss, np.float64), ref,
                               rtol=1e-4, atol=1e-5)

    # --- Case 2: exercises the multi-tile grid + D/row padding paths ---
    M1, M2, D2 = 200, 24, 96
    fa = jax.random.normal(keys[5], (M1, D2), jnp.float32)
    fb = jax.random.normal(keys[6], (M2, D2), jnp.float32)
    mk = (jax.random.uniform(keys[7], (M1, M2)) > 0.5).astype(jnp.float32)
    msa = jax.random.uniform(keys[8], (M1,)) > 0.3
    msb = jax.random.uniform(keys[9], (M2,)) > 0.3

    loss2 = jax.block_until_ready(
        sub_cross_loss(fa, fb, mk, msa, msb, tile_rows=128))
    ref2 = _reference_loss(fa, fb, mk, msa, msb)
    np.testing.assert_allclose(np.asarray(loss2, np.float64), ref2,
                               rtol=1e-3, atol=1e-3)

    print("KERNEL_OK")
</pallas_src>

<mosaic_0001>
module attributes {stable_mosaic.version = 11 : i64} {
  func.func @_direction_kernel(%arg0: i32, %arg1: memref<8x128xf32, #tpu.memory_space<vmem>>, %arg2: memref<8x128xf32, #tpu.memory_space<vmem>>, %arg3: memref<8x8xf32, #tpu.memory_space<vmem>>, %arg4: memref<8x8xf32, #tpu.memory_space<vmem>>, %arg5: memref<1x8x128xf32, #tpu.memory_space<vmem>>, %arg6: memref<8x8xf32, #tpu.memory_space<vmem>>) attributes {dimension_semantics = [#tpu.dimension_semantics<parallel>], iteration_bounds = array<i64: 1>, scalar_prefetch = 0 : i64, scratch_operands = 1 : i64, tpu.core_type = #tpu.core_type<tc>, window_params = [{transform_indices = @transform_0, window_bounds = array<i64: 8, 128>}, {pipeline_mode = #tpu.pipeline_mode<synchronous>, transform_indices = @transform_1, window_bounds = array<i64: 8, 128>}, {transform_indices = @transform_2, window_bounds = array<i64: 8, 8>}, {transform_indices = @transform_3, window_bounds = array<i64: 8, 8>}, {transform_indices = @transform_4, window_bounds = array<i64: 1, 8, 128>}]} {
    %c0 = arith.constant 0 : index
    %c0_0 = arith.constant 0 : index
    %0 = vector.load %arg2[%c0, %c0_0] : memref<8x128xf32, #tpu.memory_space<vmem>>, vector<8x128xf32>
    %c0_1 = arith.constant 0 : index
    %c0_2 = arith.constant 0 : index
    %1 = vector.load %arg1[%c0_1, %c0_2] : memref<8x128xf32, #tpu.memory_space<vmem>>, vector<8x128xf32>
    %cst = arith.constant dense<0.000000e+00> : vector<8x8xf32>
    %2 = tpu.matmul %0, %1, %cst {dimension_numbers = #tpu.dot_dimension_numbers<[1], [1], [0], [0], [0, 0, 1, 0], [], []>} : vector<8x128xf32>, vector<8x128xf32>, vector<8x8xf32> -> vector<8x8xf32>
    %c0_3 = arith.constant 0 : index
    %c0_4 = arith.constant 0 : index
    %3 = vector.load %arg6[%c0_3, %c0_4] : memref<8x8xf32, #tpu.memory_space<vmem>>, vector<8x8xf32>
    tpu.vector_store %arg6[%c0_3, %c0_4], %2 {strides = array<i32>} : memref<8x8xf32, #tpu.memory_space<vmem>>, vector<8x8xf32>,
    %c0_5 = arith.constant 0 : index
    %c0_6 = arith.constant 0 : index
    %4 = vector.load %arg3[%c0_5, %c0_6] : memref<8x8xf32, #tpu.memory_space<vmem>>, vector<8x8xf32>
    %c0_7 = arith.constant 0 : index
    %c0_8 = arith.constant 0 : index
    %5 = vector.load %arg4[%c0_7, %c0_8] : memref<8x8xf32, #tpu.memory_space<vmem>>, vector<8x8xf32>
    %cst_9 = arith.constant dense<0.000000e+00> : vector<8xf32>
    %6 = vector.multi_reduction <add>, %4, %cst_9 [0] : vector<8x8xf32> to vector<8xf32>
    %7 = vector.shape_cast %6 : vector<8xf32> to vector<1x8xf32>
    %cst_10 = arith.constant dense<0.000000e+00> : vector<8xf32>
    %8 = vector.multi_reduction <add>, %5, %cst_10 [0] : vector<8x8xf32> to vector<8xf32>
    %9 = vector.shape_cast %8 : vector<8xf32> to vector<1x8xf32>
    %10 = arith.mulf %7, %9 : vector<1x8xf32>
    %11 = vector.shape_cast %10 : vector<1x8xf32> to vector<1x1x8xf32>
    %cst_11 = arith.constant dense<0.000000e+00> : vector<1xf32>
    %12 = vector.multi_reduction <add>, %11, %cst_11 [1, 2] : vector<1x1x8xf32> to vector<1xf32>
    %13 = vector.shape_cast %12 : vector<1xf32> to vector<1x1x1xf32>
    %14 = vector.extract %13[0, 0, 0] : f32 from vector<1x1x1xf32>
    %cst_12 = arith.constant 0.000000e+00 : f32
    %15 = vector.broadcast %cst_12 : f32 to vector<1x8xf32>
    %c0_i32 = arith.constant 0 : i32
    %16 = arith.index_cast %c0_i32 : i32 to index
    %c0_13 = arith.constant 0 : index
    %17 = vector.load %arg6[%16, %c0_13] : memref<8x8xf32, #tpu.memory_space<vmem>>, vector<1x8xf32>
    %18 = arith.index_cast %c0_i32 : i32 to index
    %c0_14 = arith.constant 0 : index
    %19 = vector.load %arg3[%18, %c0_14] : memref<8x8xf32, #tpu.memory_space<vmem>>, vector<1x8xf32>
    %20 = vector.broadcast %17 : vector<1x8xf32> to vector<8x8xf32>
    %21 = arith.subf %2, %20 : vector<8x8xf32>
    %cst_15 = arith.constant 0.000000e+00 : f32
    %22 = vector.broadcast %cst_15 : f32 to vector<8x8xf32>
    %23 = arith.maximumf %21, %22 : vector<8x8xf32>
    %24 = math.absf %21 : vector<8x8xf32>
    %cst_16 = arith.constant 0.000000e+00 : f32
    %25 = vector.broadcast %cst_16 : f32 to vector<8x8xf32>
    %26 = arith.subf %25, %24 : vector<8x8xf32>
    %27 = math.exp %26 : vector<8x8xf32>
    %28 = math.log1p %27 : vector<8x8xf32>
    %29 = arith.addf %23, %28 : vector<8x8xf32>
    %30 = arith.mulf %5, %29 : vector<8x8xf32>
    %cst_17 = arith.constant dense<0.000000e+00> : vector<8xf32>
    %31 = vector.multi_reduction <add>, %30, %cst_17 [0] : vector<8x8xf32> to vector<8xf32>
    %32 = vector.shape_cast %31 : vector<8xf32> to vector<1x8xf32>
    %33 = arith.mulf %19, %32 : vector<1x8xf32>
    %34 = arith.addf %15, %33 : vector<1x8xf32>
    %c1_i32 = arith.constant 1 : i32
    %35 = arith.index_cast %c1_i32 : i32 to index
    %c0_18 = arith.constant 0 : index
    %36 = vector.load %arg6[%35, %c0_18] : memref<8x8xf32, #tpu.memory_space<vmem>>, vector<1x8xf32>
    %37 = arith.index_cast %c1_i32 : i32 to index
    %c0_19 = arith.constant 0 : index
    %38 = vector.load %arg3[%37, %c0_19] : memref<8x8xf32, #tpu.memory_space<vmem>>, vector<1x8xf32>
    %39 = vector.broadcast %36 : vector<1x8xf32> to vector<8x8xf32>
    %40 = arith.subf %2, %39 : vector<8x8xf32>
    %cst_20 = arith.constant 0.000000e+00 : f32
    %41 = vector.broadcast %cst_20 : f32 to vector<8x8xf32>
    %42 = arith.maximumf %40, %41 : vector<8x8xf32>
    %43 = math.absf %40 : vector<8x8xf32>
    %cst_21 = arith.constant 0.000000e+00 : f32
    %44 = vector.broadcast %cst_21 : f32 to vector<8x8xf32>
    %45 = arith.subf %44, %43 : vector<8x8xf32>
    %46 = math.exp %45 : vector<8x8xf32>
    %47 = math.log1p %46 : vector<8x8xf32>
    %48 = arith.addf %42, %47 : vector<8x8xf32>
    %49 = arith.mulf %5, %48 : vector<8x8xf32>
    %cst_22 = arith.constant dense<0.000000e+00> : vector<8xf32>
    %50 = vector.multi_reduction <add>, %49, %cst_22 [0] : vector<8x8xf32> to vector<8xf32>
    %51 = vector.shape_cast %50 : vector<8xf32> to vector<1x8xf32>
    %52 = arith.mulf %38, %51 : vector<1x8xf32>
    %53 = arith.addf %34, %52 : vector<1x8xf32>
    %c2_i32 = arith.constant 2 : i32
    %54 = arith.index_cast %c2_i32 : i32 to index
    %c0_23 = arith.constant 0 : index
    %55 = vector.load %arg6[%54, %c0_23] : memref<8x8xf32, #tpu.memory_space<vmem>>, vector<1x8xf32>
    %56 = arith.index_cast %c2_i32 : i32 to index
    %c0_24 = arith.constant 0 : index
    %57 = vector.load %arg3[%56, %c0_24] : memref<8x8xf32, #tpu.memory_space<vmem>>, vector<1x8xf32>
    %58 = vector.broadcast %55 : vector<1x8xf32> to vector<8x8xf32>
    %59 = arith.subf %2, %58 : vector<8x8xf32>
    %cst_25 = arith.constant 0.000000e+00 : f32
    %60 = vector.broadcast %cst_25 : f32 to vector<8x8xf32>
    %61 = arith.maximumf %59, %60 : vector<8x8xf32>
    %62 = math.absf %59 : vector<8x8xf32>
    %cst_26 = arith.constant 0.000000e+00 : f32
    %63 = vector.broadcast %cst_26 : f32 to vector<8x8xf32>
    %64 = arith.subf %63, %62 : vector<8x8xf32>
    %65 = math.exp %64 : vector<8x8xf32>
    %66 = math.log1p %65 : vector<8x8xf32>
    %67 = arith.addf %61, %66 : vector<8x8xf32>
    %68 = arith.mulf %5, %67 : vector<8x8xf32>
    %cst_27 = arith.constant dense<0.000000e+00> : vector<8xf32>
    %69 = vector.multi_reduction <add>, %68, %cst_27 [0] : vector<8x8xf32> to vector<8xf32>
    %70 = vector.shape_cast %69 : vector<8xf32> to vector<1x8xf32>
    %71 = arith.mulf %57, %70 : vector<1x8xf32>
    %72 = arith.addf %53, %71 : vector<1x8xf32>
    %c3_i32 = arith.constant 3 : i32
    %73 = arith.index_cast %c3_i32 : i32 to index
    %c0_28 = arith.constant 0 : index
    %74 = vector.load %arg6[%73, %c0_28] : memref<8x8xf32, #tpu.memory_space<vmem>>, vector<1x8xf32>
    %75 = arith.index_cast %c3_i32 : i32 to index
    %c0_29 = arith.constant 0 : index
    %76 = vector.load %arg3[%75, %c0_29] : memref<8x8xf32, #tpu.memory_space<vmem>>, vector<1x8xf32>
    %77 = vector.broadcast %74 : vector<1x8xf32> to vector<8x8xf32>
    %78 = arith.subf %2, %77 : vector<8x8xf32>
    %cst_30 = arith.constant 0.000000e+00 : f32
    %79 = vector.broadcast %cst_30 : f32 to vector<8x8xf32>
    %80 = arith.maximumf %78, %79 : vector<8x8xf32>
    %81 = math.absf %78 : vector<8x8xf32>
    %cst_31 = arith.constant 0.000000e+00 : f32
    %82 = vector.broadcast %cst_31 : f32 to vector<8x8xf32>
    %83 = arith.subf %82, %81 : vector<8x8xf32>
    %84 = math.exp %83 : vector<8x8xf32>
    %85 = math.log1p %84 : vector<8x8xf32>
    %86 = arith.addf %80, %85 : vector<8x8xf32>
    %87 = arith.mulf %5, %86 : vector<8x8xf32>
    %cst_32 = arith.constant dense<0.000000e+00> : vector<8xf32>
    %88 = vector.multi_reduction <add>, %87, %cst_32 [0] : vector<8x8xf32> to vector<8xf32>
    %89 = vector.shape_cast %88 : vector<8xf32> to vector<1x8xf32>
    %90 = arith.mulf %76, %89 : vector<1x8xf32>
    %91 = arith.addf %72, %90 : vector<1x8xf32>
    %c4_i32 = arith.constant 4 : i32
    %92 = arith.index_cast %c4_i32 : i32 to index
    %c0_33 = arith.constant 0 : index
    %93 = vector.load %arg6[%92, %c0_33] : memref<8x8xf32, #tpu.memory_space<vmem>>, vector<1x8xf32>
    %94 = arith.index_cast %c4_i32 : i32 to index
    %c0_34 = arith.constant 0 : index
    %95 = vector.load %arg3[%94, %c0_34] : memref<8x8xf32, #tpu.memory_space<vmem>>, vector<1x8xf32>
    %96 = vector.broadcast %93 : vector<1x8xf32> to vector<8x8xf32>
    %97 = arith.subf %2, %96 : vector<8x8xf32>
    %cst_35 = arith.constant 0.000000e+00 : f32
    %98 = vector.broadcast %cst_35 : f32 to vector<8x8xf32>
    %99 = arith.maximumf %97, %98 : vector<8x8xf32>
    %100 = math.absf %97 : vector<8x8xf32>
    %cst_36 = arith.constant 0.000000e+00 : f32
    %101 = vector.broadcast %cst_36 : f32 to vector<8x8xf32>
    %102 = arith.subf %101, %100 : vector<8x8xf32>
    %103 = math.exp %102 : vector<8x8xf32>
    %104 = math.log1p %103 : vector<8x8xf32>
    %105 = arith.addf %99, %104 : vector<8x8xf32>
    %106 = arith.mulf %5, %105 : vector<8x8xf32>
    %cst_37 = arith.constant dense<0.000000e+00> : vector<8xf32>
    %107 = vector.multi_reduction <add>, %106, %cst_37 [0] : vector<8x8xf32> to vector<8xf32>
    %108 = vector.shape_cast %107 : vector<8xf32> to vector<1x8xf32>
    %109 = arith.mulf %95, %108 : vector<1x8xf32>
    %110 = arith.addf %91, %109 : vector<1x8xf32>
    %c5_i32 = arith.constant 5 : i32
    %111 = arith.index_cast %c5_i32 : i32 to index
    %c0_38 = arith.constant 0 : index
    %112 = vector.load %arg6[%111, %c0_38] : memref<8x8xf32, #tpu.memory_space<vmem>>, vector<1x8xf32>
    %113 = arith.index_cast %c5_i32 : i32 to index
    %c0_39 = arith.constant 0 : index
    %114 = vector.load %arg3[%113, %c0_39] : memref<8x8xf32, #tpu.memory_space<vmem>>, vector<1x8xf32>
    %115 = vector.broadcast %112 : vector<1x8xf32> to vector<8x8xf32>
    %116 = arith.subf %2, %115 : vector<8x8xf32>
    %cst_40 = arith.constant 0.000000e+00 : f32
    %117 = vector.broadcast %cst_40 : f32 to vector<8x8xf32>
    %118 = arith.maximumf %116, %117 : vector<8x8xf32>
    %119 = math.absf %116 : vector<8x8xf32>
    %cst_41 = arith.constant 0.000000e+00 : f32
    %120 = vector.broadcast %cst_41 : f32 to vector<8x8xf32>
    %121 = arith.subf %120, %119 : vector<8x8xf32>
    %122 = math.exp %121 : vector<8x8xf32>
    %123 = math.log1p %122 : vector<8x8xf32>
    %124 = arith.addf %118, %123 : vector<8x8xf32>
    %125 = arith.mulf %5, %124 : vector<8x8xf32>
    %cst_42 = arith.constant dense<0.000000e+00> : vector<8xf32>
    %126 = vector.multi_reduction <add>, %125, %cst_42 [0] : vector<8x8xf32> to vector<8xf32>
    %127 = vector.shape_cast %126 : vector<8xf32> to vector<1x8xf32>
    %128 = arith.mulf %114, %127 : vector<1x8xf32>
    %129 = arith.addf %110, %128 : vector<1x8xf32>
    %c6_i32 = arith.constant 6 : i32
    %130 = arith.index_cast %c6_i32 : i32 to index
    %c0_43 = arith.constant 0 : index
    %131 = vector.load %arg6[%130, %c0_43] : memref<8x8xf32, #tpu.memory_space<vmem>>, vector<1x8xf32>
    %132 = arith.index_cast %c6_i32 : i32 to index
    %c0_44 = arith.constant 0 : index
    %133 = vector.load %arg3[%132, %c0_44] : memref<8x8xf32, #tpu.memory_space<vmem>>, vector<1x8xf32>
    %134 = vector.broadcast %131 : vector<1x8xf32> to vector<8x8xf32>
    %135 = arith.subf %2, %134 : vector<8x8xf32>
    %cst_45 = arith.constant 0.000000e+00 : f32
    %136 = vector.broadcast %cst_45 : f32 to vector<8x8xf32>
    %137 = arith.maximumf %135, %136 : vector<8x8xf32>
    %138 = math.absf %135 : vector<8x8xf32>
    %cst_46 = arith.constant 0.000000e+00 : f32
    %139 = vector.broadcast %cst_46 : f32 to vector<8x8xf32>
    %140 = arith.subf %139, %138 : vector<8x8xf32>
    %141 = math.exp %140 : vector<8x8xf32>
    %142 = math.log1p %141 : vector<8x8xf32>
    %143 = arith.addf %137, %142 : vector<8x8xf32>
    %144 = arith.mulf %5, %143 : vector<8x8xf32>
    %cst_47 = arith.constant dense<0.000000e+00> : vector<8xf32>
    %145 = vector.multi_reduction <add>, %144, %cst_47 [0] : vector<8x8xf32> to vector<8xf32>
    %146 = vector.shape_cast %145 : vector<8xf32> to vector<1x8xf32>
    %147 = arith.mulf %133, %146 : vector<1x8xf32>
    %148 = arith.addf %129, %147 : vector<1x8xf32>
    %c7_i32 = arith.constant 7 : i32
    %149 = arith.index_cast %c7_i32 : i32 to index
    %c0_48 = arith.constant 0 : index
    %150 = vector.load %arg6[%149, %c0_48] : memref<8x8xf32, #tpu.memory_space<vmem>>, vector<1x8xf32>
    %151 = arith.index_cast %c7_i32 : i32 to index
    %c0_49 = arith.constant 0 : index
    %152 = vector.load %arg3[%151, %c0_49] : memref<8x8xf32, #tpu.memory_space<vmem>>, vector<1x8xf32>
    %153 = vector.broadcast %150 : vector<1x8xf32> to vector<8x8xf32>
    %154 = arith.subf %2, %153 : vector<8x8xf32>
    %cst_50 = arith.constant 0.000000e+00 : f32
    %155 = vector.broadcast %cst_50 : f32 to vector<8x8xf32>
    %156 = arith.maximumf %154, %155 : vector<8x8xf32>
    %157 = math.absf %154 : vector<8x8xf32>
    %cst_51 = arith.constant 0.000000e+00 : f32
    %158 = vector.broadcast %cst_51 : f32 to vector<8x8xf32>
    %159 = arith.subf %158, %157 : vector<8x8xf32>
    %160 = math.exp %159 : vector<8x8xf32>
    %161 = math.log1p %160 : vector<8x8xf32>
    %162 = arith.addf %156, %161 : vector<8x8xf32>
    %163 = arith.mulf %5, %162 : vector<8x8xf32>
    %cst_52 = arith.constant dense<0.000000e+00> : vector<8xf32>
    %164 = vector.multi_reduction <add>, %163, %cst_52 [0] : vector<8x8xf32> to vector<8xf32>
    %165 = vector.shape_cast %164 : vector<8xf32> to vector<1x8xf32>
    %166 = arith.mulf %152, %165 : vector<1x8xf32>
    %167 = arith.addf %148, %166 : vector<1x8xf32>
    %c8_i32 = arith.constant 8 : i32
    %168 = vector.shape_cast %167 : vector<1x8xf32> to vector<1x1x8xf32>
    %cst_53 = arith.constant dense<0.000000e+00> : vector<1xf32>
    %169 = vector.multi_reduction <add>, %168, %cst_53 [1, 2] : vector<1x1x8xf32> to vector<1xf32>
    %170 = vector.shape_cast %169 : vector<1xf32> to vector<1x1x1xf32>
    %171 = vector.extract %170[0, 0, 0] : f32 from vector<1x1x1xf32>
    %172 = tpu.iota {dimensions = array<i32: 0>} : vector<8x128xi32>
    %c0_i32_54 = arith.constant 0 : i32
    %173 = vector.broadcast %c0_i32_54 : i32 to vector<8x128xi32>
    %174 = arith.cmpi eq, %172, %173 : vector<8x128xi32>
    %c1_i32_55 = arith.constant 1 : i32
    %175 = vector.broadcast %c1_i32_55 : i32 to vector<8x128xi32>
    %176 = arith.cmpi eq, %172, %175 : vector<8x128xi32>
    %cst_56 = arith.constant 0.000000e+00 : f32
    %177 = vector.broadcast %14 : f32 to vector<8x128xf32>
    %178 = vector.broadcast %cst_56 : f32 to vector<8x128xf32>
    %179 = arith.select %176, %177, %178 : vector<8x128xi1>, vector<8x128xf32>
    %180 = vector.broadcast %171 : f32 to vector<8x128xf32>
    %181 = arith.select %174, %180, %179 : vector<8x128xi1>, vector<8x128xf32>
    %182 = vector.shape_cast %181 : vector<8x128xf32> to vector<1x8x128xf32>
    %c0_57 = arith.constant 0 : index
    %c0_58 = arith.constant 0 : index
    %c0_59 = arith.constant 0 : index
    %183 = vector.load %arg5[%c0_57, %c0_58, %c0_59] : memref<1x8x128xf32, #tpu.memory_space<vmem>>, vector<1x8x128xf32>
    tpu.vector_store %arg5[%c0_57, %c0_58, %c0_59], %182 {strides = array<i32>} : memref<1x8x128xf32, #tpu.memory_space<vmem>>, vector<1x8x128xf32>,
    return
  }
  func.func @transform_0(%arg0: i32) -> (i32, i32) {
    %c0_i32 = arith.constant 0 : i32
    %c0_i32_0 = arith.constant 0 : i32
    return %arg0, %c0_i32 : i32, i32
  }
  func.func @transform_1(%arg0: i32) -> (i32, i32) {
    %c0_i32 = arith.constant 0 : i32
    %c0_i32_0 = arith.constant 0 : i32
    %c0_i32_1 = arith.constant 0 : i32
    return %c0_i32, %c0_i32_0 : i32, i32
  }
  func.func @transform_2(%arg0: i32) -> (i32, i32) {
    %c0_i32 = arith.constant 0 : i32
    %c0_i32_0 = arith.constant 0 : i32
    return %c0_i32, %arg0 : i32, i32
  }
  func.func @transform_3(%arg0: i32) -> (i32, i32) {
    %c0_i32 = arith.constant 0 : i32
    %c0_i32_0 = arith.constant 0 : i32
    return %c0_i32, %arg0 : i32, i32
  }
  func.func @transform_4(%arg0: i32) -> (i32, i32, i32) {
    %c0_i32 = arith.constant 0 : i32
    %c0_i32_0 = arith.constant 0 : i32
    %c0_i32_1 = arith.constant 0 : i32
    return %arg0, %c0_i32, %c0_i32_0 : i32, i32, i32
  }
}

</mosaic_0001>

<llo_original>
// kernel: tpu_custom_call.1
$region0: #{tpu_custom_call.1}
  #allocation0 [shape = 'u32[]', space=smem, size = 0x4, offset = 0x4, fixed_abs, tag = 'smem constant byte address 0x4 - core index']
  #allocation1 [shape = 'u32[144,128]{1,0:T(1,128)}', space=vmem, size = 0x12000, scoped, tag = 'internal scratch']
  #allocation2 [shape = 'f32[8,8]{1,0:T(8,128)}', space=vmem, size = 0x1000, scoped, tag = 'scratch operand']
  %s0 = inlined_call_operand.hbm [shape: f32[8,128], index: 0, kind: input, shape index: {}]
  %s1 = inlined_call_operand.hbm [shape: f32[8,128], index: 1, kind: input, shape index: {}]
  %s2 = inlined_call_operand.hbm [shape: f32[8,8], index: 2, kind: input, shape index: {}]
  %s3 = inlined_call_operand.vmem [shape: f32[8,8], index: 3, kind: input, shape index: {}]
  %s4 = inlined_call_operand.hbm [shape: f32[1,8,128], index: 4, kind: output, shape index: {}]
  %s5 = sld [smem:[#allocation0]]
  $region38: #{tpu_custom_call.1} parent=0
    _
  %s7 = ssub.s32 1, %s5
  %s8 = scalar_select 0, %s7, %s5
  $region1: #{tpu_custom_call.1} parent=0
    #allocation3 [shape = 'u8[4096]{0}', space=vmem, size = 0x1000, scoped, tag = 'input window, operand 0, single buffered']
    #allocation4 [shape = 's32[1]{0}', space=sflag, size = 0x4, scoped, tag = 'scoped memory for tpu_custom_call.1']
    #allocation5 [shape = 's32[1]{0}', space=sflag, size = 0x4, scoped, tag = 'scoped memory for tpu_custom_call.1']
    #allocation6 [shape = 'u8[4096]{0}', space=vmem, size = 0x1000, scoped, tag = 'input window, operand 1, single buffered']
    #allocation7 [shape = 's32[1]{0}', space=sflag, size = 0x4, scoped, tag = 'scoped memory for tpu_custom_call.1']
    #allocation8 [shape = 'u8[4096]{0}', space=vmem, size = 0x1000, scoped, tag = 'input window, operand 2, single buffered']
    #allocation9 [shape = 'u8[4096]{0}', space=vmem, size = 0x1000, scoped, tag = 'output window, operand 0, single buffered']
    %9 = vsyncpa [#allocation4], 0
    %10 = vsyncpa [#allocation7], 0
    %11 = vsyncpa [#allocation5], 0
    // Predicated region
    $region2: #{tpu_custom_call.1} parent=1 // pred_check
      _
    $region3: #{tpu_custom_call.1} parent=1 // pred_check_branch
      %13 = sbr.rel (0) target = $region5
    $region4: #{tpu_custom_call.1} parent=1 // pred_region
      %s15 = ssub.s32 128, 128
      %16 = vsyncadd [#allocation4], %s15
      %s18 = sshll.u32 [#allocation3], 4
      %s19 = int_to_ptr.vmem [resolvable:$true] %s18
      %21 = dma.hbm_to_vmem [thread:$0]  %s0, 128, %s19, [#allocation4]
    $region5: #{tpu_custom_call.1} parent=1 // pred_fallthru
      _
    // Predicated region
    $region6: #{tpu_custom_call.1} parent=1 // pred_check
      _
    $region7: #{tpu_custom_call.1} parent=1 // pred_check_branch
      %23 = sbr.rel (0) target = $region9
    $region8: #{tpu_custom_call.1} parent=1 // pred_region
      %s25 = ssub.s32 128, 128
      %26 = vsyncadd [#allocation7], %s25
      %s28 = sshll.u32 [#allocation6], 4
      %s29 = int_to_ptr.vmem [resolvable:$true] %s28
      %31 = dma.hbm_to_vmem [thread:$0]  %s1, 128, %s29, [#allocation7]
    $region9: #{tpu_custom_call.1} parent=1 // pred_fallthru
      _
    // Predicated region
    $region10: #{tpu_custom_call.1} parent=1 // pred_check
      _
    $region11: #{tpu_custom_call.1} parent=1 // pred_check_branch
      %33 = sbr.rel (0) target = $region13
    $region12: #{tpu_custom_call.1} parent=1 // pred_region
      %s35 = ssub.s32 128, 128
      %36 = vsyncadd [#allocation7], %s35
      %s38 = sshll.u32 [#allocation8], 4
      %s39 = int_to_ptr.vmem [resolvable:$true] %s38
      %41 = dma.hbm_to_vmem [thread:$0]  %s2, 128, %s39, [#allocation7]
    $region13: #{tpu_custom_call.1} parent=1 // pred_fallthru
      _
    // Predicated region
    $region14: #{tpu_custom_call.1} parent=1 // pred_check
      _
    $region15: #{tpu_custom_call.1} parent=1 // pred_check_branch
      %43 = sbr.rel (0) target = $region17
    $region16: #{tpu_custom_call.1} parent=1 // pred_region
      _
    $region17: #{tpu_custom_call.1} parent=1 // pred_fallthru
      _
    // Predicated region
    $region18: #{tpu_custom_call.1} parent=1 // pred_check
      _
    $region19: #{tpu_custom_call.1} parent=1 // pred_check_branch
      %45 = sbr.rel (0) target = $region21
    $region20: #{tpu_custom_call.1} parent=1 // pred_region
      %46 = dma.done [#allocation4], 128
    $region21: #{tpu_custom_call.1} parent=1 // pred_fallthru
      _
    // Predicated region
    $region22: #{tpu_custom_call.1} parent=1 // pred_check
      _
    $region23: #{tpu_custom_call.1} parent=1 // pred_check_branch
      %48 = sbr.rel (0) target = $region25
    $region24: #{tpu_custom_call.1} parent=1 // pred_region
      %49 = dma.done [#allocation7], 128
    $region25: #{tpu_custom_call.1} parent=1 // pred_fallthru
      _
    // Predicated region
    $region26: #{tpu_custom_call.1} parent=1 // pred_check
      _
    $region27: #{tpu_custom_call.1} parent=1 // pred_check_branch
      %51 = sbr.rel (0) target = $region29
    $region28: #{tpu_custom_call.1} parent=1 // pred_region
      %52 = dma.done [#allocation7], 128
    $region29: #{tpu_custom_call.1} parent=1 // pred_fallthru
      _
    %v53 = vld [vmem:[#allocation6] sm:$0xff]
    %v54 = vld [vmem:[#allocation3] sm:$0xff]
    %55 = vmatprep.subr.mxu0 0.0
    %56 = vmatpush1.xpose.msra.mxu0 %v54
    %57 = vmatprep.subr.mxu0 0.0
    %58 = vmatpush1.xpose.msra.mxu0 0.0
    %59 = vmatprep.subr.mxu0 0.0
    %60 = vmatpush1.xpose.msra.mxu0 0.0
    %61 = vmatprep.subr.mxu0 0.0
    %62 = vmatpush1.xpose.msra.mxu0 0.0
    %63 = vmatprep.subr.mxu0 0.0
    %64 = vmatpush1.xpose.msra.mxu0 0.0
    %65 = vmatprep.subr.mxu0 0.0
    %66 = vmatpush1.xpose.msra.mxu0 0.0
    %67 = vmatprep.subr.mxu0 0.0
    %68 = vmatpush1.xpose.msra.mxu0 0.0
    %69 = vmatprep.subr.mxu0 0.0
    %70 = vmatpush1.xpose.msra.mxu0 0.0
    %71 = vmatprep.subr.mxu0 0.0
    %72 = vmatpush1.xpose.msra.mxu0 0.0
    %73 = vmatprep.subr.mxu0 0.0
    %74 = vmatpush1.xpose.msra.mxu0 0.0
    %75 = vmatprep.subr.mxu0 0.0
    %76 = vmatpush1.xpose.msra.mxu0 0.0
    %77 = vmatprep.subr.mxu0 0.0
    %78 = vmatpush1.xpose.msra.mxu0 0.0
    %79 = vmatprep.subr.mxu0 0.0
    %80 = vmatpush1.xpose.msra.mxu0 0.0
    %81 = vmatprep.subr.mxu0 0.0
    %82 = vmatpush1.xpose.msra.mxu0 0.0
    %83 = vmatprep.subr.mxu0 0.0
    %84 = vmatpush1.xpose.msra.mxu0 0.0
    %85 = vmatprep.subr.mxu0 0.0
    %86 = vmatpush1.xpose.msra.mxu0 0.0
    %87 = vmatprep.subr.mxu0 0.0
    %88 = vmatpush1.xpose.msra.mxu0 0.0
    %89 = vmatprep.subr.mxu0 0.0
    %90 = vmatpush1.xpose.msra.mxu0 0.0
    %91 = vmatprep.subr.mxu0 0.0
    %92 = vmatpush1.xpose.msra.mxu0 0.0
    %93 = vmatprep.subr.mxu0 0.0
    %94 = vmatpush1.xpose.msra.mxu0 0.0
    %95 = vmatprep.subr.mxu0 0.0
    %96 = vmatpush1.xpose.msra.mxu0 0.0
    %97 = vmatprep.subr.mxu0 0.0
    %98 = vmatpush1.xpose.msra.mxu0 0.0
    %99 = vmatprep.subr.mxu0 0.0
    %100 = vmatpush1.xpose.msra.mxu0 0.0
    %101 = vmatprep.subr.mxu0 0.0
    %102 = vmatpush1.xpose.msra.mxu0 0.0
    %103 = vmatprep.subr.mxu0 0.0
    %104 = vmatpush1.xpose.msra.mxu0 0.0
    %105 = vmatprep.subr.mxu0 0.0
    %106 = vmatpush1.xpose.msra.mxu0 0.0
    %107 = vmatprep.subr.mxu0 0.0
    %108 = vmatpush1.xpose.msra.mxu0 0.0
    %109 = vmatprep.subr.mxu0 0.0
    %110 = vmatpush1.xpose.msra.mxu0 0.0
    %111 = vmatprep.subr.mxu0 0.0
    %112 = vmatpush1.xpose.msra.mxu0 0.0
    %113 = vmatprep.subr.mxu0 0.0
    %114 = vmatpush1.xpose.msra.mxu0 0.0
    %115 = vmatprep.subr.mxu0 0.0
    %116 = vmatpush1.xpose.msra.mxu0 0.0
    %117 = vmatprep.subr.mxu0 0.0
    %118 = vmatpush1.xpose.msra.mxu0 0.0
    %119 = vmatprep.mubr.f32.mxu0 0.0
    %120 = vmatmul.mubr.f32.gmra.mrb[0].mxu0 %v53
    %v121 = vpop.f32.mrb[0].mxu0
    %v122 = vadd.f32 0.0, %v121
    %v123 = vpop.f32.mrb[0].mxu0
    %124 = vdwg.mxu0
    %vm125 = vcmask 64512
    %126 = vst.msk [vmem:[#allocation2] sm:$0xff] %vm125, %v122
    %v127 = vld [vmem:[#allocation8] sm:$0xff]
    %v128 = vld [vmem:[%s3] sm:$0xff]
    %v129 = vsel %vm125, %v127, 0.0
    %v130 = vrot.slane %v129, 4
    %v131 = vadd.f32 %v129, %v130
    %v132 = vrot.slane %v131, 2
    %v133 = vadd.f32 %v131, %v132
    %v134 = vrot.slane %v133, 1
    %v135 = vadd.f32 %v133, %v134
    %v136 = vsel %vm125, %v128, 0.0
    %v137 = vrot.slane %v136, 4
    %v138 = vadd.f32 %v136, %v137
    %v139 = vrot.slane %v138, 2
    %v140 = vadd.f32 %v138, %v139
    %v141 = vrot.slane %v140, 1
    %v142 = vadd.f32 %v140, %v141
    %v143 = vmul.f32 %v135, %v142
    %vm144 = vcmask 57344
    %v145 = vsel %vm144, %v143, 0.0
    %146 = vadd.xlane.f32.xlu0 %v145
    %v147 = vpop.xlane.xlu0 %146
    %v148 = vrot.slane %v147, 4
    %v149 = vadd.f32 %v147, %v148
    %v150 = vrot.slane %v149, 2
    %v151 = vadd.f32 %v149, %v150
    %v152 = vrot.slane %v151, 1
    %v153 = vadd.f32 %v151, %v152
    %s154 = vtos %v153
    %v155 = vld [vmem:[#allocation2] sm:$0x1]
    %v156 = vld [vmem:[#allocation8] sm:$0x1]
    %v157 = vlaneseq
    %v158 = vshrl.u32 %v157, 7
    %v159 = vsub.s32 0, %v158
    %v160 = vrot.slane %v155, %v159
    %v161 = vsub.f32 %v122, %v160
    %v162 = vmax.f32 %v161, 0.0
    %v163 = vand.u32 2147483647, %v161
    %v164 = vsub.f32 0.0, %v163
    %v165 = vmul.f32 %v164, 1.442695
    %v166 = vpow.pop %v165
    %v167 = vadd.f32 %v166, 1.0
    %v168 = vlog2.pop %v167
    %v169 = vmul.f32 %v168, 0.6931472
    %v170 = vmul.f32 -0.5, %v166
    %v171 = vadd.f32 %v170, 1.0
    %v172 = vmul.f32 %v171, %v166
    %v173 = vand.u32 2147483647, %v166
    %vm174 = vcmp.lt.f32.partialorder %v173, 0.0004427343
    %v175 = vsel %vm174, %v172, %v169
    %v176 = vadd.f32 %v162, %v175
    %v177 = vmul.f32 %v128, %v176
    %v178 = vsel %vm125, %v177, 0.0
    %v179 = vrot.slane %v178, 4
    %v180 = vadd.f32 %v178, %v179
    %v181 = vrot.slane %v180, 2
    %v182 = vadd.f32 %v180, %v181
    %v183 = vrot.slane %v182, 1
    %v184 = vadd.f32 %v182, %v183
    %v185 = vmul.f32 %v156, %v184
    %v186 = vadd.f32 %v185, 0.0
    %v187 = vld [vmem:[#allocation2 + $0x1] sm:$0x1]
    %v188 = vld [vmem:[#allocation8 + $0x1] sm:$0x1]
    %v189 = vlaneseq
    %v190 = vshrl.u32 %v189, 7
    %v191 = vsub.s32 0, %v190
    %v192 = vrot.slane %v187, %v191
    %v193 = vsub.f32 %v122, %v192
    %v194 = vmax.f32 %v193, 0.0
    %v195 = vand.u32 2147483647, %v193
    %v196 = vsub.f32 0.0, %v195
    %v197 = vmul.f32 %v196, 1.442695
    %v198 = vpow.pop %v197
    %v199 = vadd.f32 %v198, 1.0
    %v200 = vlog2.pop %v199
    %v201 = vmul.f32 %v200, 0.6931472
    %v202 = vmul.f32 -0.5, %v198
    %v203 = vadd.f32 %v202, 1.0
    %v204 = vmul.f32 %v203, %v198
    %v205 = vand.u32 2147483647, %v198
    %vm206 = vcmp.lt.f32.partialorder %v205, 0.0004427343
    %v207 = vsel %vm206, %v204, %v201
    %v208 = vadd.f32 %v194, %v207
    %v209 = vmul.f32 %v128, %v208
    %v210 = vsel %vm125, %v209, 0.0
    %v211 = vrot.slane %v210, 4
    %v212 = vadd.f32 %v210, %v211
    %v213 = vrot.slane %v212, 2
    %v214 = vadd.f32 %v212, %v213
    %v215 = vrot.slane %v214, 1
    %v216 = vadd.f32 %v214, %v215
    %v217 = vmul.f32 %v188, %v216
    %v218 = vadd.f32 %v186, %v217
    %v219 = vld [vmem:[#allocation2 + $0x2] sm:$0x1]
    %v220 = vld [vmem:[#allocation8 + $0x2] sm:$0x1]
    %v221 = vlaneseq
    %v222 = vshrl.u32 %v221, 7
    %v223 = vsub.s32 0, %v222
    %v224 = vrot.slane %v219, %v223
    %v225 = vsub.f32 %v122, %v224
    %v226 = vmax.f32 %v225, 0.0
    %v227 = vand.u32 2147483647, %v225
    %v228 = vsub.f32 0.0, %v227
    %v229 = vmul.f32 %v228, 1.442695
    %v230 = vpow.pop %v229
    %v231 = vadd.f32 %v230, 1.0
    %v232 = vlog2.pop %v231
    %v233 = vmul.f32 %v232, 0.6931472
    %v234 = vmul.f32 -0.5, %v230
    %v235 = vadd.f32 %v234, 1.0
    %v236 = vmul.f32 %v235, %v230
    %v237 = vand.u32 2147483647, %v230
    %vm238 = vcmp.lt.f32.partialorder %v237, 0.0004427343
    %v239 = vsel %vm238, %v236, %v233
    %v240 = vadd.f32 %v226, %v239
    %v241 = vmul.f32 %v128, %v240
    %v242 = vsel %vm125, %v241, 0.0
    %v243 = vrot.slane %v242, 4
    %v244 = vadd.f32 %v242, %v243
    %v245 = vrot.slane %v244, 2
    %v246 = vadd.f32 %v244, %v245
    %v247 = vrot.slane %v246, 1
    %v248 = vadd.f32 %v246, %v247
    %v249 = vmul.f32 %v220, %v248
    %v250 = vadd.f32 %v218, %v249
    %v251 = vld [vmem:[#allocation2 + $0x3] sm:$0x1]
    %v252 = vld [vmem:[#allocation8 + $0x3] sm:$0x1]
    %v253 = vlaneseq
    %v254 = vshrl.u32 %v253, 7
    %v255 = vsub.s32 0, %v254
    %v256 = vrot.slane %v251, %v255
    %v257 = vsub.f32 %v122, %v256
    %v258 = vmax.f32 %v257, 0.0
    %v259 = vand.u32 2147483647, %v257
    %v260 = vsub.f32 0.0, %v259
    %v261 = vmul.f32 %v260, 1.442695
    %v262 = vpow.pop %v261
    %v263 = vadd.f32 %v262, 1.0
    %v264 = vlog2.pop %v263
    %v265 = vmul.f32 %v264, 0.6931472
    %v266 = vmul.f32 -0.5, %v262
    %v267 = vadd.f32 %v266, 1.0
    %v268 = vmul.f32 %v267, %v262
    %v269 = vand.u32 2147483647, %v262
    %vm270 = vcmp.lt.f32.partialorder %v269, 0.0004427343
    %v271 = vsel %vm270, %v268, %v265
    %v272 = vadd.f32 %v258, %v271
    %v273 = vmul.f32 %v128, %v272
    %v274 = vsel %vm125, %v273, 0.0
    %v275 = vrot.slane %v274, 4
    %v276 = vadd.f32 %v274, %v275
    %v277 = vrot.slane %v276, 2
    %v278 = vadd.f32 %v276, %v277
    %v279 = vrot.slane %v278, 1
    %v280 = vadd.f32 %v278, %v279
    %v281 = vmul.f32 %v252, %v280
    %v282 = vadd.f32 %v250, %v281
    %v283 = vld [vmem:[#allocation2 + $0x4] sm:$0x1]
    %v284 = vld [vmem:[#allocation8 + $0x4] sm:$0x1]
    %v285 = vlaneseq
    %v286 = vshrl.u32 %v285, 7
    %v287 = vsub.s32 0, %v286
    %v288 = vrot.slane %v283, %v287
    %v289 = vsub.f32 %v122, %v288
    %v290 = vmax.f32 %v289, 0.0
    %v291 = vand.u32 2147483647, %v289
    %v292 = vsub.f32 0.0, %v291
    %v293 = vmul.f32 %v292, 1.442695
    %v294 = vpow.pop %v293
    %v295 = vadd.f32 %v294, 1.0
    %v296 = vlog2.pop %v295
    %v297 = vmul.f32 %v296, 0.6931472
    %v298 = vmul.f32 -0.5, %v294
    %v299 = vadd.f32 %v298, 1.0
    %v300 = vmul.f32 %v299, %v294
    %v301 = vand.u32 2147483647, %v294
    %vm302 = vcmp.lt.f32.partialorder %v301, 0.0004427343
    %v303 = vsel %vm302, %v300, %v297
    %v304 = vadd.f32 %v290, %v303
    %v305 = vmul.f32 %v128, %v304
    %v306 = vsel %vm125, %v305, 0.0
    %v307 = vrot.slane %v306, 4
    %v308 = vadd.f32 %v306, %v307
    %v309 = vrot.slane %v308, 2
    %v310 = vadd.f32 %v308, %v309
    %v311 = vrot.slane %v310, 1
    %v312 = vadd.f32 %v310, %v311
    %v313 = vmul.f32 %v284, %v312
    %v314 = vadd.f32 %v282, %v313
    %v315 = vld [vmem:[#allocation2 + $0x5] sm:$0x1]
    %v316 = vld [vmem:[#allocation8 + $0x5] sm:$0x1]
    %v317 = vlaneseq
    %v318 = vshrl.u32 %v317, 7
    %v319 = vsub.s32 0, %v318
    %v320 = vrot.slane %v315, %v319
    %v321 = vsub.f32 %v122, %v320
    %v322 = vmax.f32 %v321, 0.0
    %v323 = vand.u32 2147483647, %v321
    %v324 = vsub.f32 0.0, %v323
    %v325 = vmul.f32 %v324, 1.442695
    %v326 = vpow.pop %v325
    %v327 = vadd.f32 %v326, 1.0
    %v328 = vlog2.pop %v327
    %v329 = vmul.f32 %v328, 0.6931472
    %v330 = vmul.f32 -0.5, %v326
    %v331 = vadd.f32 %v330, 1.0
    %v332 = vmul.f32 %v331, %v326
    %v333 = vand.u32 2147483647, %v326
    %vm334 = vcmp.lt.f32.partialorder %v333, 0.0004427343
    %v335 = vsel %vm334, %v332, %v329
    %v336 = vadd.f32 %v322, %v335
    %v337 = vmul.f32 %v128, %v336
    %v338 = vsel %vm125, %v337, 0.0
    %v339 = vrot.slane %v338, 4
    %v340 = vadd.f32 %v338, %v339
    %v341 = vrot.slane %v340, 2
    %v342 = vadd.f32 %v340, %v341
    %v343 = vrot.slane %v342, 1
    %v344 = vadd.f32 %v342, %v343
    %v345 = vmul.f32 %v316, %v344
    %v346 = vadd.f32 %v314, %v345
    %v347 = vld [vmem:[#allocation2 + $0x6] sm:$0x1]
    %v348 = vld [vmem:[#allocation8 + $0x6] sm:$0x1]
    %v349 = vlaneseq
    %v350 = vshrl.u32 %v349, 7
    %v351 = vsub.s32 0, %v350
    %v352 = vrot.slane %v347, %v351
    %v353 = vsub.f32 %v122, %v352
    %v354 = vmax.f32 %v353, 0.0
    %v355 = vand.u32 2147483647, %v353
    %v356 = vsub.f32 0.0, %v355
    %v357 = vmul.f32 %v356, 1.442695
    %v358 = vpow.pop %v357
    %v359 = vadd.f32 %v358, 1.0
    %v360 = vlog2.pop %v359
    %v361 = vmul.f32 %v360, 0.6931472
    %v362 = vmul.f32 -0.5, %v358
    %v363 = vadd.f32 %v362, 1.0
    %v364 = vmul.f32 %v363, %v358
    %v365 = vand.u32 2147483647, %v358
    %vm366 = vcmp.lt.f32.partialorder %v365, 0.0004427343
    %v367 = vsel %vm366, %v364, %v361
    %v368 = vadd.f32 %v354, %v367
    %v369 = vmul.f32 %v128, %v368
    %v370 = vsel %vm125, %v369, 0.0
    %v371 = vrot.slane %v370, 4
    %v372 = vadd.f32 %v370, %v371
    %v373 = vrot.slane %v372, 2
    %v374 = vadd.f32 %v372, %v373
    %v375 = vrot.slane %v374, 1
    %v376 = vadd.f32 %v374, %v375
    %v377 = vmul.f32 %v348, %v376
    %v378 = vadd.f32 %v346, %v377
    %v379 = vld [vmem:[#allocation2 + $0x7] sm:$0x1]
    %v380 = vld [vmem:[#allocation8 + $0x7] sm:$0x1]
    %v381 = vlaneseq
    %v382 = vshrl.u32 %v381, 7
    %v383 = vsub.s32 0, %v382
    %v384 = vrot.slane %v379, %v383
    %v385 = vsub.f32 %v122, %v384
    %v386 = vmax.f32 %v385, 0.0
    %v387 = vand.u32 2147483647, %v385
    %v388 = vsub.f32 0.0, %v387
    %v389 = vmul.f32 %v388, 1.442695
    %v390 = vpow.pop %v389
    %v391 = vadd.f32 %v390, 1.0
    %v392 = vlog2.pop %v391
    %v393 = vmul.f32 %v392, 0.6931472
    %v394 = vmul.f32 -0.5, %v390
    %v395 = vadd.f32 %v394, 1.0
    %v396 = vmul.f32 %v395, %v390
    %v397 = vand.u32 2147483647, %v390
    %vm398 = vcmp.lt.f32.partialorder %v397, 0.0004427343
    %v399 = vsel %vm398, %v396, %v393
    %v400 = vadd.f32 %v386, %v399
    %v401 = vmul.f32 %v128, %v400
    %v402 = vsel %vm125, %v401, 0.0
    %v403 = vrot.slane %v402, 4
    %v404 = vadd.f32 %v402, %v403
    %v405 = vrot.slane %v404, 2
    %v406 = vadd.f32 %v404, %v405
    %v407 = vrot.slane %v406, 1
    %v408 = vadd.f32 %v406, %v407
    %v409 = vmul.f32 %v380, %v408
    %v410 = vadd.f32 %v378, %v409
    %v411 = vsel %vm144, %v410, 0.0
    %412 = vadd.xlane.f32.xlu0 %v411
    %v413 = vpop.xlane.xlu0 %412
    %v414 = vrot.slane %v413, 4
    %v415 = vadd.f32 %v413, %v414
    %v416 = vrot.slane %v415, 2
    %v417 = vadd.f32 %v415, %v416
    %v418 = vrot.slane %v417, 1
    %v419 = vadd.f32 %v417, %v418
    %s420 = vtos %v419
    %v421 = vlaneseq
    %v422 = vshrl.u32 %v421, 7
    %vm423 = vcmp.eq.s32.totalorder %v422, 0
    %vm424 = vcmp.eq.s32.totalorder %v422, 1
    %v425 = vstv %s154
    %v426 = vsel %vm424, %v425, 0.0
    %v427 = vstv %s420
    %v428 = vsel %vm423, %v427, %v426
    %429 = vst [vmem:[#allocation9] sm:$0xff] %v428
    // Predicated region
    $region30: #{tpu_custom_call.1} parent=1 // pred_check
      _
    $region31: #{tpu_custom_call.1} parent=1 // pred_check_branch
      %431 = sbr.rel (0) target = $region33
    $region32: #{tpu_custom_call.1} parent=1 // pred_region
      %s433 = ssub.s32 128, 128
      %434 = vsyncadd [#allocation5], %s433
      %s436 = sshll.u32 [#allocation9], 4
      %s437 = int_to_ptr.vmem [resolvable:$true] %s436
      %439 = dma.vmem_to_hbm [thread:$0]  %s437, 128, %s4, [#allocation5]
    $region33: #{tpu_custom_call.1} parent=1 // pred_fallthru
      _
    // Predicated region
    $region34: #{tpu_custom_call.1} parent=1 // pred_check
      _
    $region35: #{tpu_custom_call.1} parent=1 // pred_check_branch
      %441 = sbr.rel (0) target = $region37
    $region36: #{tpu_custom_call.1} parent=1 // pred_region
      %442 = dma.done [#allocation5], 128
    $region37: #{tpu_custom_call.1} parent=1 // pred_fallthru
      _
    %443 = vsyncpa [#allocation4], 1
    %444 = vsyncpa [#allocation7], 1
    %445 = vsyncpa [#allocation5], 1

</llo_original>
